<compile_context>
chip_gen: v7x
topology: tpu7x:2x2x1
jax: 0.10.0
libtpu: 0.0.40
codegen_flags: <defaults>
</compile_context>

<pallas_src>
import functools

import jax
import jax.numpy as jnp
import numpy as np
from jax.experimental import pallas as pl
from jax.experimental.pallas import tpu as pltpu


def _round_up(v, m):
    return -(-v // m) * m


def _cdiv(a, b):
    return -(-a // b)


def _vmem_limit_bytes():
    """Scoped-VMEM limit to request: physical minus headroom, capped at 100 MiB."""
    try:
        info = pltpu.get_tpu_info()
        phys = getattr(info, "vmem_capacity_bytes", None)
        if phys:
            return int(min(int(phys) - (8 << 20), 100 << 20))
    except Exception:
        pass
    return 56 << 20  # safe on v5e / v6e / v7x


def _plan_tiles(B, F, use_extra_neg, itemsize, budget_bytes,
                tm_cap=256, tk_cap=512):
    """Pick (TM, B_pad, nm_half, tk, F_pad, nk) that fit the VMEM budget."""
    F128 = _round_up(max(F, 1), 128)
    B8 = _round_up(max(B, 1), 8)
    while True:
        nm_half = _cdiv(B8, tm_cap)
        TM = _round_up(_cdiv(B8, nm_half), 8)
        B_pad = nm_half * TM
        R_pad = 2 * B_pad

        nk = _cdiv(F128, tk_cap)
        if nk == 1 and F128 >= 256:
            nk = 2                       # guarantee >=2 K steps -> real pipelining
        tk = _round_up(_cdiv(F128, nk), 128)
        F_pad = nk * tk

        scratch = 4 * TM * R_pad + 4 * (TM + R_pad) + 4 * 8 * 128
        if use_extra_neg:
            scratch += 4 * TM * B_pad + 4 * B_pad
        stream = (TM * tk + tk * R_pad + (tk * B_pad if use_extra_neg else 0)) * itemsize
        total = scratch + 2 * stream     # double-buffered input tiles

        if total <= budget_bytes or (tm_cap <= 8 and tk_cap <= 128):
            return TM, B_pad, nm_half, tk, F_pad, nk
        if tk_cap > 128:
            tk_cap //= 2
        else:
            tm_cap = max(8, tm_cap // 2)


def _infonce_kernel(*refs, inv_temp, sim_type, use_extra_neg, tm, b_pad, b_true):
    """Grid = (row-block m, feature tile k).

    refs layout:
      inputs : x [TM, tk] (row block of [v1; v2]), xT [tk, R_pad], [negT [tk, B_pad]]
      outputs: o [8, 128] per-row-block partial loss tile
      scratch: g_acc [TM, R_pad] f32, [gn_acc [TM, B_pad] f32],
               [rsq_acc [TM,1], xsq_acc [1,R_pad], [nsq_acc [1,B_pad]]]   (cos only)
    """
    if use_extra_neg:
        x_ref, xt_ref, negt_ref = refs[:3]
        rest = refs[3:]
    else:
        x_ref, xt_ref = refs[:2]
        negt_ref = None
        rest = refs[2:]
    o_ref = rest[0]
    scratch = list(rest[1:])
    g_acc = scratch.pop(0)
    gn_acc = scratch.pop(0) if use_extra_neg else None
    rsq_acc = xsq_acc = nsq_acc = None
    if sim_type == "cos":
        rsq_acc = scratch.pop(0)
        xsq_acc = scratch.pop(0)
        if use_extra_neg:
            nsq_acc = scratch.pop(0)

    m = pl.program_id(0)
    k = pl.program_id(1)
    nk = pl.num_programs(1)

    @pl.when(k == 0)
    def _init():
        g_acc[...] = jnp.zeros_like(g_acc)
        if use_extra_neg:
            gn_acc[...] = jnp.zeros_like(gn_acc)
        if sim_type == "cos":
            rsq_acc[...] = jnp.zeros_like(rsq_acc)
            xsq_acc[...] = jnp.zeros_like(xsq_acc)
            if use_extra_neg:
                nsq_acc[...] = jnp.zeros_like(nsq_acc)

    xl = x_ref[...]                                   # [TM, tk]
    xt = xt_ref[...]                                  # [tk, R_pad]
    g_acc[...] += jnp.dot(xl, xt, preferred_element_type=jnp.float32)
    if use_extra_neg:
        nt = negt_ref[...]                            # [tk, B_pad]
        gn_acc[...] += jnp.dot(xl, nt, preferred_element_type=jnp.float32)
    if sim_type == "cos":
        # Norm accumulation inside the K loop (hidden under the MXU); no
        # epilogue diagonal scans and no transposes needed.
        xlf = xl.astype(jnp.float32)
        rsq_acc[...] += jnp.sum(xlf * xlf, axis=-1, keepdims=True)     # [TM,1]
        xtf = xt.astype(jnp.float32)
        xsq_acc[...] += jnp.sum(xtf * xtf, axis=0, keepdims=True)      # [1,R_pad]
        if use_extra_neg:
            ntf = negt_ref[...].astype(jnp.float32)
            nsq_acc[...] += jnp.sum(ntf * ntf, axis=0, keepdims=True)  # [1,B_pad]

    @pl.when(k == nk - 1)
    def _epilogue():
        G = g_acc[...]                                # [TM, R_pad] f32
        r_pad = G.shape[1]
        NEG_INF = jnp.float32(-jnp.inf)
        inv_t = jnp.float32(inv_temp)

        row_l = jax.lax.broadcasted_iota(jnp.int32, (tm, r_pad), 0)
        col = jax.lax.broadcasted_iota(jnp.int32, (tm, r_pad), 1)
        row_g = row_l + m * tm

        inv_row = None
        if sim_type == "cos":
            tiny = jnp.float32(1e-30)
            inv_row = jax.lax.rsqrt(jnp.maximum(rsq_acc[...], tiny))   # [TM,1]
            inv_col = jax.lax.rsqrt(jnp.maximum(xsq_acc[...], tiny))   # [1,R_pad]
            G = G * inv_row * inv_col
        G = G * inv_t

        # Target logit: column row_g +- B_pad (exactly one hit per valid row).
        tgt_mask = jnp.abs(row_g - col) == b_pad
        tgt = jnp.sum(jnp.where(tgt_mask, G, 0.0), axis=-1, keepdims=True)  # [TM,1]

        # Mask own-view diagonal and padded columns in one pass.
        col_valid = (col < b_true) | ((col >= b_pad) & (col < b_pad + b_true))
        Gm = jnp.where((row_g == col) | jnp.logical_not(col_valid), NEG_INF, G)

        mx = jnp.max(Gm, axis=-1, keepdims=True)
        if use_extra_neg:
            Gn = gn_acc[...]                          # [TM, B_pad]
            if sim_type == "cos":
                inv_ncol = jax.lax.rsqrt(jnp.maximum(nsq_acc[...], jnp.float32(1e-30)))
                Gn = Gn * inv_row * inv_ncol
            Gn = Gn * inv_t
            ncol = jax.lax.broadcasted_iota(jnp.int32, Gn.shape, 1)
            Gn = jnp.where(ncol < b_true, Gn, NEG_INF)
            mx = jnp.maximum(mx, jnp.max(Gn, axis=-1, keepdims=True))
            s = (jnp.sum(jnp.exp(Gm - mx), axis=-1, keepdims=True)
                 + jnp.sum(jnp.exp(Gn - mx), axis=-1, keepdims=True))
        else:
            s = jnp.sum(jnp.exp(Gm - mx), axis=-1, keepdims=True)
        lse = mx + jnp.log(s)                          # [TM,1]

        row1 = jax.lax.broadcasted_iota(jnp.int32, (tm, 1), 0) + m * tm
        row_valid = (row1 < b_true) | ((row1 >= b_pad) & (row1 < b_pad + b_true))
        partial = jnp.sum(jnp.where(row_valid, lse - tgt, 0.0))
        o_ref[...] = jnp.full((8, 128), partial, dtype=jnp.float32)


def infonce_with_extra_neg(pos_view_1, pos_view_2, extra_neg=None, *,
                           temperature=0.5, similarity_type="cos",
                           compute_dtype=None):
    """Pallas-backed equivalent of InfoNCEWithExtraNeg.forward. Returns scalar.

    compute_dtype: optional dtype (e.g. jnp.bfloat16) the inputs are cast to
    before being fed to the MXU (f32 accumulation is kept).  None keeps the
    input dtype (bit-faithful to the PyTorch module's f32 math).
    """
    if similarity_type not in ("cos", "dot"):
        raise Exception(
            f"Invalid similarity_type for cs loss: [current:{similarity_type}]. "
            "Please choose from ['cos', 'dot']")

    v1, v2, neg = pos_view_1, pos_view_2, extra_neg
    if v1.ndim > 2:                      # matches torch .view(B, -1)
        v1 = v1.reshape(v1.shape[0], -1)
        v2 = v2.reshape(v2.shape[0], -1)
        if neg is not None:
            neg = neg.reshape(neg.shape[0], -1)

    B, F = v1.shape
    use_extra_neg = neg is not None
    dtype = jnp.dtype(compute_dtype) if compute_dtype is not None else jnp.dtype(v1.dtype)
    itemsize = dtype.itemsize

    vmem_limit = _vmem_limit_bytes()
    TM, B_pad, nm_half, tk, F_pad, nk = _plan_tiles(
        B, F, use_extra_neg, itemsize, int(vmem_limit * 0.85))
    R_pad = 2 * B_pad
    nm = 2 * nm_half

    def prep(a):
        a = a.astype(dtype)
        pad_r, pad_c = B_pad - a.shape[0], F_pad - a.shape[1]
        if pad_r or pad_c:
            a = jnp.pad(a, ((0, pad_r), (0, pad_c)))
        return a

    v1p, v2p = prep(v1), prep(v2)
    x = jnp.concatenate([v1p, v2p], axis=0)           # [R_pad, F_pad]
    xT = x.T                                          # [F_pad, R_pad] (one-time)

    inputs = [x, xT]
    in_specs = [pl.BlockSpec((TM, tk), lambda m, k: (m, k)),
                pl.BlockSpec((tk, R_pad), lambda m, k: (k, 0))]
    scratch = [pltpu.VMEM((TM, R_pad), jnp.float32)]
    if use_extra_neg:
        negT = prep(neg).T                            # [F_pad, B_pad]
        inputs.append(negT)
        in_specs.append(pl.BlockSpec((tk, B_pad), lambda m, k: (k, 0)))
        scratch.append(pltpu.VMEM((TM, B_pad), jnp.float32))
    if similarity_type == "cos":
        scratch.append(pltpu.VMEM((TM, 1), jnp.float32))
        scratch.append(pltpu.VMEM((1, R_pad), jnp.float32))
        if use_extra_neg:
            scratch.append(pltpu.VMEM((1, B_pad), jnp.float32))

    kernel = functools.partial(
        _infonce_kernel,
        inv_temp=1.0 / float(temperature),
        sim_type=similarity_type,
        use_extra_neg=use_extra_neg,
        tm=TM, b_pad=B_pad, b_true=B)

    out = pl.pallas_call(
        kernel,
        out_shape=jax.ShapeDtypeStruct((nm * 8, 128), jnp.float32),
        grid_spec=pltpu.PrefetchScalarGridSpec(
            num_scalar_prefetch=0,
            grid=(nm, nk),
            in_specs=in_specs,
            out_specs=pl.BlockSpec((8, 128), lambda m, k: (m, 0)),
            scratch_shapes=scratch),
        compiler_params=pltpu.CompilerParams(
            dimension_semantics=("parallel", "arbitrary"),
            vmem_limit_bytes=int(vmem_limit)),
    )(*inputs)

    partials = out.reshape(nm, 8, 128)[:, 0, 0]
    return jnp.sum(partials) / jnp.float32(2 * B)


def _reference_loss(v1, v2, neg, temperature, sim_type):
    """Pure-JAX reference mirroring the PyTorch module (for verification)."""
    v1 = v1.reshape(v1.shape[0], -1).astype(jnp.float32)
    v2 = v2.reshape(v2.shape[0], -1).astype(jnp.float32)
    if neg is not None:
        neg = neg.reshape(neg.shape[0], -1).astype(jnp.float32)

    def sim(a, b):
        h = a @ b.T
        if sim_type == "cos":
            na = jnp.sqrt(jnp.sum(a ** 2, -1))[:, None]
            nb = jnp.sqrt(jnp.sum(b ** 2, -1))[None, :]
            h = h / (na @ nb)
        return h

    B = v1.shape[0]
    s11, s22, s12 = sim(v1, v1), sim(v2, v2), sim(v1, v2)
    eye = jnp.eye(B, dtype=bool)
    s11 = jnp.where(eye, -jnp.inf, s11)
    s22 = jnp.where(eye, -jnp.inf, s22)
    l1, l2 = [s12, s11], [s22, s12.T]
    if neg is not None:
        l1.append(sim(v1, neg))
        l2.append(sim(v2, neg))
    logits = jnp.concatenate(
        [jnp.concatenate(l1, -1), jnp.concatenate(l2, -1)], 0) / temperature
    tgt = jnp.arange(2 * B)
    lse = jax.scipy.special.logsumexp(logits, axis=-1)
    return jnp.mean(lse - logits[jnp.arange(2 * B), tgt])


if __name__ == "__main__":
    key = jax.random.PRNGKey(0)
    k1, k2, k3, k4, k5, k6 = jax.random.split(key, 6)

    # Test 1: [B, max_len, dim], cos + extra negatives.
    B, L, D = 8, 4, 32                       # flattened F = 128
    pv1 = jax.random.normal(k1, (B, L, D), dtype=jnp.float32)
    pv2 = jax.random.normal(k2, (B, L, D), dtype=jnp.float32)
    ngv = jax.random.normal(k3, (B, L, D), dtype=jnp.float32)

    loss = jax.block_until_ready(
        infonce_with_extra_neg(pv1, pv2, ngv, temperature=0.5, similarity_type="cos"))
    ref = jax.block_until_ready(_reference_loss(pv1, pv2, ngv, 0.5, "cos"))
    np.testing.assert_allclose(np.asarray(loss), np.asarray(ref), rtol=1e-4, atol=1e-5)

    # Test 2: dot similarity, no extra negatives.
    loss2 = jax.block_until_ready(
        infonce_with_extra_neg(pv1, pv2, None, temperature=0.5, similarity_type="dot"))
    ref2 = jax.block_until_ready(_reference_loss(pv1, pv2, None, 0.5, "dot"))
    np.testing.assert_allclose(np.asarray(loss2), np.asarray(ref2), rtol=1e-4, atol=1e-4)

    # Test 3: feature dim not tile-aligned (F = 800) -> multiple K tiles.
    B2, L2, D2 = 8, 5, 160
    pv1b = jax.random.normal(k4, (B2, L2, D2), dtype=jnp.float32)
    pv2b = jax.random.normal(k5, (B2, L2, D2), dtype=jnp.float32)
    ngvb = jax.random.normal(k6, (B2, L2, D2), dtype=jnp.float32)
    loss3 = jax.block_until_ready(
        infonce_with_extra_neg(pv1b, pv2b, ngvb, temperature=0.5, similarity_type="cos"))
    ref3 = jax.block_until_ready(_reference_loss(pv1b, pv2b, ngvb, 0.5, "cos"))
    np.testing.assert_allclose(np.asarray(loss3), np.asarray(ref3), rtol=1e-4, atol=1e-5)

    # Test 4: bf16 MXU path (opt-in), looser tolerance vs f32 reference.
    loss4 = jax.block_until_ready(
        infonce_with_extra_neg(pv1, pv2, ngv, temperature=0.5, similarity_type="cos",
                               compute_dtype=jnp.bfloat16))
    np.testing.assert_allclose(np.asarray(loss4), np.asarray(ref), rtol=3e-2, atol=3e-2)

    print("KERNEL_OK")
</pallas_src>

<mosaic_0001>
module attributes {stable_mosaic.version = 11 : i64} {
  func.func @_infonce_kernel(%arg0: i32, %arg1: i32, %arg2: memref<8x128xf32, #tpu.memory_space<vmem>>, %arg3: memref<128x16xf32, #tpu.memory_space<vmem>>, %arg4: memref<128x8xf32, #tpu.memory_space<vmem>>, %arg5: memref<8x128xf32, #tpu.memory_space<vmem>>, %arg6: memref<8x16xf32, #tpu.memory_space<vmem>>, %arg7: memref<8x8xf32, #tpu.memory_space<vmem>>, %arg8: memref<8x1xf32, #tpu.memory_space<vmem>>, %arg9: memref<1x16xf32, #tpu.memory_space<vmem>>, %arg10: memref<1x8xf32, #tpu.memory_space<vmem>>) attributes {dimension_semantics = [#tpu.dimension_semantics<parallel>, #tpu.dimension_semantics<arbitrary>], iteration_bounds = array<i64: 2, 1>, scalar_prefetch = 0 : i64, scratch_operands = 5 : i64, tpu.core_type = #tpu.core_type<tc>, window_params = [{transform_indices = @transform_0, window_bounds = array<i64: 8, 128>}, {transform_indices = @transform_1, window_bounds = array<i64: 128, 16>}, {transform_indices = @transform_2, window_bounds = array<i64: 128, 8>}, {transform_indices = @transform_3, window_bounds = array<i64: 8, 128>}]} {
    %c0_i32 = arith.constant 0 : i32
    %0 = arith.cmpi eq, %arg1, %c0_i32 : i32
    %1 = arith.extui %0 : i1 to i32
    %c0_i32_0 = arith.constant 0 : i32
    %2 = arith.cmpi ne, %1, %c0_i32_0 : i32
    scf.if %2 {
      %cst_34 = arith.constant 0.000000e+00 : f32
      %36 = vector.broadcast %cst_34 : f32 to vector<8x16xf32>
      %c0_35 = arith.constant 0 : index
      %c0_36 = arith.constant 0 : index
      %37 = vector.load %arg6[%c0_35, %c0_36] : memref<8x16xf32, #tpu.memory_space<vmem>>, vector<8x16xf32>
      tpu.vector_store %arg6[%c0_35, %c0_36], %36 {strides = array<i32>} : memref<8x16xf32, #tpu.memory_space<vmem>>, vector<8x16xf32>,
      %cst_37 = arith.constant 0.000000e+00 : f32
      %38 = vector.broadcast %cst_37 : f32 to vector<8x8xf32>
      %c0_38 = arith.constant 0 : index
      %c0_39 = arith.constant 0 : index
      %39 = vector.load %arg7[%c0_38, %c0_39] : memref<8x8xf32, #tpu.memory_space<vmem>>, vector<8x8xf32>
      tpu.vector_store %arg7[%c0_38, %c0_39], %38 {strides = array<i32>} : memref<8x8xf32, #tpu.memory_space<vmem>>, vector<8x8xf32>,
      %cst_40 = arith.constant 0.000000e+00 : f32
      %40 = vector.broadcast %cst_40 : f32 to vector<8x1xf32>
      %c0_41 = arith.constant 0 : index
      %c0_42 = arith.constant 0 : index
      %41 = vector.load %arg8[%c0_41, %c0_42] : memref<8x1xf32, #tpu.memory_space<vmem>>, vector<8x1xf32>
      tpu.vector_store %arg8[%c0_41, %c0_42], %40 {strides = array<i32>} : memref<8x1xf32, #tpu.memory_space<vmem>>, vector<8x1xf32>,
      %cst_43 = arith.constant 0.000000e+00 : f32
      %42 = vector.broadcast %cst_43 : f32 to vector<1x16xf32>
      %c0_44 = arith.constant 0 : index
      %c0_45 = arith.constant 0 : index
      %43 = vector.load %arg9[%c0_44, %c0_45] : memref<1x16xf32, #tpu.memory_space<vmem>>, vector<1x16xf32>
      tpu.vector_store %arg9[%c0_44, %c0_45], %42 {strides = array<i32>} : memref<1x16xf32, #tpu.memory_space<vmem>>, vector<1x16xf32>,
      %cst_46 = arith.constant 0.000000e+00 : f32
      %44 = vector.broadcast %cst_46 : f32 to vector<1x8xf32>
      %c0_47 = arith.constant 0 : index
      %c0_48 = arith.constant 0 : index
      %45 = vector.load %arg10[%c0_47, %c0_48] : memref<1x8xf32, #tpu.memory_space<vmem>>, vector<1x8xf32>
      tpu.vector_store %arg10[%c0_47, %c0_48], %44 {strides = array<i32>} : memref<1x8xf32, #tpu.memory_space<vmem>>, vector<1x8xf32>,
    } else {
    }
    %c0 = arith.constant 0 : index
    %c0_1 = arith.constant 0 : index
    %3 = vector.load %arg2[%c0, %c0_1] : memref<8x128xf32, #tpu.memory_space<vmem>>, vector<8x128xf32>
    %c0_2 = arith.constant 0 : index
    %c0_3 = arith.constant 0 : index
    %4 = vector.load %arg3[%c0_2, %c0_3] : memref<128x16xf32, #tpu.memory_space<vmem>>, vector<128x16xf32>
    %c0_4 = arith.constant 0 : index
    %c0_5 = arith.constant 0 : index
    %5 = vector.load %arg6[%c0_4, %c0_5] : memref<8x16xf32, #tpu.memory_space<vmem>>, vector<8x16xf32>
    %cst = arith.constant dense<0.000000e+00> : vector<8x16xf32>
    %6 = tpu.matmul %3, %4, %cst {dimension_numbers = #tpu.dot_dimension_numbers<[1], [0], [0], [1], [0, 0, 1, 1], [], []>} : vector<8x128xf32>, vector<128x16xf32>, vector<8x16xf32> -> vector<8x16xf32>
    %7 = arith.addf %5, %6 : vector<8x16xf32>
    %c0_6 = arith.constant 0 : index
    %c0_7 = arith.constant 0 : index
    %8 = vector.load %arg6[%c0_6, %c0_7] : memref<8x16xf32, #tpu.memory_space<vmem>>, vector<8x16xf32>
    tpu.vector_store %arg6[%c0_6, %c0_7], %7 {strides = array<i32>} : memref<8x16xf32, #tpu.memory_space<vmem>>, vector<8x16xf32>,
    %c0_8 = arith.constant 0 : index
    %c0_9 = arith.constant 0 : index
    %9 = vector.load %arg4[%c0_8, %c0_9] : memref<128x8xf32, #tpu.memory_space<vmem>>, vector<128x8xf32>
    %c0_10 = arith.constant 0 : index
    %c0_11 = arith.constant 0 : index
    %10 = vector.load %arg7[%c0_10, %c0_11] : memref<8x8xf32, #tpu.memory_space<vmem>>, vector<8x8xf32>
    %cst_12 = arith.constant dense<0.000000e+00> : vector<8x8xf32>
    %11 = tpu.matmul %3, %9, %cst_12 {dimension_numbers = #tpu.dot_dimension_numbers<[1], [0], [0], [1], [0, 0, 1, 1], [], []>} : vector<8x128xf32>, vector<128x8xf32>, vector<8x8xf32> -> vector<8x8xf32>
    %12 = arith.addf %10, %11 : vector<8x8xf32>
    %c0_13 = arith.constant 0 : index
    %c0_14 = arith.constant 0 : index
    %13 = vector.load %arg7[%c0_13, %c0_14] : memref<8x8xf32, #tpu.memory_space<vmem>>, vector<8x8xf32>
    tpu.vector_store %arg7[%c0_13, %c0_14], %12 {strides = array<i32>} : memref<8x8xf32, #tpu.memory_space<vmem>>, vector<8x8xf32>,
    %c0_15 = arith.constant 0 : index
    %c0_16 = arith.constant 0 : index
    %14 = vector.load %arg8[%c0_15, %c0_16] : memref<8x1xf32, #tpu.memory_space<vmem>>, vector<8x1xf32>
    %15 = arith.mulf %3, %3 : vector<8x128xf32>
    %cst_17 = arith.constant dense<0.000000e+00> : vector<8xf32>
    %16 = vector.multi_reduction <add>, %15, %cst_17 [1] : vector<8x128xf32> to vector<8xf32>
    %17 = vector.shape_cast %16 : vector<8xf32> to vector<8x1xf32>
    %18 = arith.addf %14, %17 : vector<8x1xf32>
    %c0_18 = arith.constant 0 : index
    %c0_19 = arith.constant 0 : index
    %19 = vector.load %arg8[%c0_18, %c0_19] : memref<8x1xf32, #tpu.memory_space<vmem>>, vector<8x1xf32>
    tpu.vector_store %arg8[%c0_18, %c0_19], %18 {strides = array<i32>} : memref<8x1xf32, #tpu.memory_space<vmem>>, vector<8x1xf32>,
    %c0_20 = arith.constant 0 : index
    %c0_21 = arith.constant 0 : index
    %20 = vector.load %arg9[%c0_20, %c0_21] : memref<1x16xf32, #tpu.memory_space<vmem>>, vector<1x16xf32>
    %21 = arith.mulf %4, %4 : vector<128x16xf32>
    %cst_22 = arith.constant dense<0.000000e+00> : vector<16xf32>
    %22 = vector.multi_reduction <add>, %21, %cst_22 [0] : vector<128x16xf32> to vector<16xf32>
    %23 = vector.shape_cast %22 : vector<16xf32> to vector<1x16xf32>
    %24 = arith.addf %20, %23 : vector<1x16xf32>
    %c0_23 = arith.constant 0 : index
    %c0_24 = arith.constant 0 : index
    %25 = vector.load %arg9[%c0_23, %c0_24] : memref<1x16xf32, #tpu.memory_space<vmem>>, vector<1x16xf32>
    tpu.vector_store %arg9[%c0_23, %c0_24], %24 {strides = array<i32>} : memref<1x16xf32, #tpu.memory_space<vmem>>, vector<1x16xf32>,
    %c0_25 = arith.constant 0 : index
    %c0_26 = arith.constant 0 : index
    %26 = vector.load %arg4[%c0_25, %c0_26] : memref<128x8xf32, #tpu.memory_space<vmem>>, vector<128x8xf32>
    %c0_27 = arith.constant 0 : index
    %c0_28 = arith.constant 0 : index
    %27 = vector.load %arg10[%c0_27, %c0_28] : memref<1x8xf32, #tpu.memory_space<vmem>>, vector<1x8xf32>
    %28 = arith.mulf %26, %26 : vector<128x8xf32>
    %cst_29 = arith.constant dense<0.000000e+00> : vector<8xf32>
    %29 = vector.multi_reduction <add>, %28, %cst_29 [0] : vector<128x8xf32> to vector<8xf32>
    %30 = vector.shape_cast %29 : vector<8xf32> to vector<1x8xf32>
    %31 = arith.addf %27, %30 : vector<1x8xf32>
    %c0_30 = arith.constant 0 : index
    %c0_31 = arith.constant 0 : index
    %32 = vector.load %arg10[%c0_30, %c0_31] : memref<1x8xf32, #tpu.memory_space<vmem>>, vector<1x8xf32>
    tpu.vector_store %arg10[%c0_30, %c0_31], %31 {strides = array<i32>} : memref<1x8xf32, #tpu.memory_space<vmem>>, vector<1x8xf32>,
    %c0_i32_32 = arith.constant 0 : i32
    %33 = arith.cmpi eq, %arg1, %c0_i32_32 : i32
    %34 = arith.extui %33 : i1 to i32
    %c0_i32_33 = arith.constant 0 : i32
    %35 = arith.cmpi ne, %34, %c0_i32_33 : i32
    scf.if %35 {
      %c0_34 = arith.constant 0 : index
      %c0_35 = arith.constant 0 : index
      %36 = vector.load %arg6[%c0_34, %c0_35] : memref<8x16xf32, #tpu.memory_space<vmem>>, vector<8x16xf32>
      %37 = tpu.iota {dimensions = array<i32: 0>} : vector<8x16xi32>
      %38 = tpu.iota {dimensions = array<i32: 1>} : vector<8x16xi32>
      %c8_i32 = arith.constant 8 : i32
      %39 = arith.muli %arg0, %c8_i32 : i32
      %40 = vector.broadcast %39 : i32 to vector<8x16xi32>
      %41 = arith.addi %37, %40 : vector<8x16xi32>
      %c0_36 = arith.constant 0 : index
      %c0_37 = arith.constant 0 : index
      %42 = vector.load %arg8[%c0_36, %c0_37] : memref<8x1xf32, #tpu.memory_space<vmem>>, vector<8x1xf32>
      %cst_38 = arith.constant 1.000000e-30 : f32
      %43 = vector.broadcast %cst_38 : f32 to vector<8x1xf32>
      %44 = arith.maximumf %42, %43 : vector<8x1xf32>
      %45 = math.rsqrt %44 : vector<8x1xf32>
      %c0_39 = arith.constant 0 : index
      %c0_40 = arith.constant 0 : index
      %46 = vector.load %arg9[%c0_39, %c0_40] : memref<1x16xf32, #tpu.memory_space<vmem>>, vector<1x16xf32>
      %cst_41 = arith.constant 1.000000e-30 : f32
      %47 = vector.broadcast %cst_41 : f32 to vector<1x16xf32>
      %48 = arith.maximumf %46, %47 : vector<1x16xf32>
      %49 = math.rsqrt %48 : vector<1x16xf32>
      %50 = vector.broadcast %45 : vector<8x1xf32> to vector<8x16xf32>
      %51 = arith.mulf %36, %50 : vector<8x16xf32>
      %52 = vector.broadcast %49 : vector<1x16xf32> to vector<8x16xf32>
      %53 = arith.mulf %51, %52 : vector<8x16xf32>
      %cst_42 = arith.constant 2.000000e+00 : f32
      %54 = vector.broadcast %cst_42 : f32 to vector<8x16xf32>
      %55 = arith.mulf %53, %54 : vector<8x16xf32>
      %56 = arith.subi %41, %38 : vector<8x16xi32>
      %57 = math.absi %56 : vector<8x16xi32>
      %c8_i32_43 = arith.constant 8 : i32
      %58 = vector.broadcast %c8_i32_43 : i32 to vector<8x16xi32>
      %59 = arith.cmpi eq, %57, %58 : vector<8x16xi32>
      %cst_44 = arith.constant 0.000000e+00 : f32
      %60 = vector.broadcast %cst_44 : f32 to vector<8x16xf32>
      %61 = arith.select %59, %55, %60 : vector<8x16xi1>, vector<8x16xf32>
      %cst_45 = arith.constant dense<0.000000e+00> : vector<8xf32>
      %62 = vector.multi_reduction <add>, %61, %cst_45 [1] : vector<8x16xf32> to vector<8xf32>
      %63 = vector.shape_cast %62 : vector<8xf32> to vector<8x1xf32>
      %c8_i32_46 = arith.constant 8 : i32
      %64 = vector.broadcast %c8_i32_46 : i32 to vector<8x16xi32>
      %65 = arith.cmpi slt, %38, %64 : vector<8x16xi32>
      %c8_i32_47 = arith.constant 8 : i32
      %66 = vector.broadcast %c8_i32_47 : i32 to vector<8x16xi32>
      %67 = arith.cmpi sge, %38, %66 : vector<8x16xi32>
      %c16_i32 = arith.constant 16 : i32
      %68 = vector.broadcast %c16_i32 : i32 to vector<8x16xi32>
      %69 = arith.cmpi slt, %38, %68 : vector<8x16xi32>
      %70 = arith.andi %67, %69 : vector<8x16xi1>
      %71 = arith.ori %65, %70 : vector<8x16xi1>
      %72 = arith.cmpi eq, %41, %38 : vector<8x16xi32>
      %cst_48 = arith.constant dense<true> : vector<8x16xi1>
      %73 = arith.xori %71, %cst_48 : vector<8x16xi1>
      %74 = arith.ori %72, %73 : vector<8x16xi1>
      %cst_49 = arith.constant 0xFF800000 : f32
      %75 = vector.broadcast %cst_49 : f32 to vector<8x16xf32>
      %76 = arith.select %74, %75, %55 : vector<8x16xi1>, vector<8x16xf32>
      %cst_50 = arith.constant dense<0xFF800000> : vector<8xf32>
      %77 = vector.multi_reduction <maximumf>, %76, %cst_50 [1] : vector<8x16xf32> to vector<8xf32>
      %78 = vector.shape_cast %77 : vector<8xf32> to vector<8x1xf32>
      %c0_51 = arith.constant 0 : index
      %c0_52 = arith.constant 0 : index
      %79 = vector.load %arg7[%c0_51, %c0_52] : memref<8x8xf32, #tpu.memory_space<vmem>>, vector<8x8xf32>
      %c0_53 = arith.constant 0 : index
      %c0_54 = arith.constant 0 : index
      %80 = vector.load %arg10[%c0_53, %c0_54] : memref<1x8xf32, #tpu.memory_space<vmem>>, vector<1x8xf32>
      %cst_55 = arith.constant 1.000000e-30 : f32
      %81 = vector.broadcast %cst_55 : f32 to vector<1x8xf32>
      %82 = arith.maximumf %80, %81 : vector<1x8xf32>
      %83 = math.rsqrt %82 : vector<1x8xf32>
      %84 = vector.broadcast %45 : vector<8x1xf32> to vector<8x8xf32>
      %85 = arith.mulf %79, %84 : vector<8x8xf32>
      %86 = vector.broadcast %83 : vector<1x8xf32> to vector<8x8xf32>
      %87 = arith.mulf %85, %86 : vector<8x8xf32>
      %cst_56 = arith.constant 2.000000e+00 : f32
      %88 = vector.broadcast %cst_56 : f32 to vector<8x8xf32>
      %89 = arith.mulf %87, %88 : vector<8x8xf32>
      %90 = tpu.iota {dimensions = array<i32: 1>} : vector<8x8xi32>
      %c8_i32_57 = arith.constant 8 : i32
      %91 = vector.broadcast %c8_i32_57 : i32 to vector<8x8xi32>
      %92 = arith.cmpi slt, %90, %91 : vector<8x8xi32>
      %cst_58 = arith.constant 0xFF800000 : f32
      %93 = vector.broadcast %cst_58 : f32 to vector<8x8xf32>
      %94 = arith.select %92, %89, %93 : vector<8x8xi1>, vector<8x8xf32>
      %cst_59 = arith.constant dense<0xFF800000> : vector<8xf32>
      %95 = vector.multi_reduction <maximumf>, %94, %cst_59 [1] : vector<8x8xf32> to vector<8xf32>
      %96 = vector.shape_cast %95 : vector<8xf32> to vector<8x1xf32>
      %97 = arith.maximumf %78, %96 : vector<8x1xf32>
      %98 = vector.broadcast %97 : vector<8x1xf32> to vector<8x16xf32>
      %99 = arith.subf %76, %98 : vector<8x16xf32>
      %100 = math.exp %99 : vector<8x16xf32>
      %cst_60 = arith.constant dense<0.000000e+00> : vector<8xf32>
      %101 = vector.multi_reduction <add>, %100, %cst_60 [1] : vector<8x16xf32> to vector<8xf32>
      %102 = vector.shape_cast %101 : vector<8xf32> to vector<8x1xf32>
      %103 = vector.broadcast %97 : vector<8x1xf32> to vector<8x8xf32>
      %104 = arith.subf %94, %103 : vector<8x8xf32>
      %105 = math.exp %104 : vector<8x8xf32>
      %cst_61 = arith.constant dense<0.000000e+00> : vector<8xf32>
      %106 = vector.multi_reduction <add>, %105, %cst_61 [1] : vector<8x8xf32> to vector<8xf32>
      %107 = vector.shape_cast %106 : vector<8xf32> to vector<8x1xf32>
      %108 = arith.addf %102, %107 : vector<8x1xf32>
      %109 = math.log %108 : vector<8x1xf32>
      %110 = arith.addf %97, %109 : vector<8x1xf32>
      %111 = tpu.iota {dimensions = array<i32: 0>} : vector<8x1xi32>
      %c8_i32_62 = arith.constant 8 : i32
      %112 = arith.muli %arg0, %c8_i32_62 : i32
      %113 = vector.broadcast %112 : i32 to vector<8x1xi32>
      %114 = arith.addi %111, %113 : vector<8x1xi32>
      %c8_i32_63 = arith.constant 8 : i32
      %115 = vector.broadcast %c8_i32_63 : i32 to vector<8x1xi32>
      %116 = arith.cmpi slt, %114, %115 : vector<8x1xi32>
      %c8_i32_64 = arith.constant 8 : i32
      %117 = vector.broadcast %c8_i32_64 : i32 to vector<8x1xi32>
      %118 = arith.cmpi sge, %114, %117 : vector<8x1xi32>
      %c16_i32_65 = arith.constant 16 : i32
      %119 = vector.broadcast %c16_i32_65 : i32 to vector<8x1xi32>
      %120 = arith.cmpi slt, %114, %119 : vector<8x1xi32>
      %121 = arith.andi %118, %120 : vector<8x1xi1>
      %122 = arith.ori %116, %121 : vector<8x1xi1>
      %123 = arith.subf %110, %63 : vector<8x1xf32>
      %cst_66 = arith.constant 0.000000e+00 : f32
      %124 = vector.broadcast %cst_66 : f32 to vector<8x1xf32>
      %125 = arith.select %122, %123, %124 : vector<8x1xi1>, vector<8x1xf32>
      %126 = vector.shape_cast %125 : vector<8x1xf32> to vector<1x8x1xf32>
      %cst_67 = arith.constant dense<0.000000e+00> : vector<1xf32>
      %127 = vector.multi_reduction <add>, %126, %cst_67 [1, 2] : vector<1x8x1xf32> to vector<1xf32>
      %128 = vector.shape_cast %127 : vector<1xf32> to vector<1x1x1xf32>
      %129 = vector.extract %128[0, 0, 0] : f32 from vector<1x1x1xf32>
      %130 = vector.broadcast %129 : f32 to vector<8x128xf32>
      %c0_68 = arith.constant 0 : index
      %c0_69 = arith.constant 0 : index
      %131 = vector.load %arg5[%c0_68, %c0_69] : memref<8x128xf32, #tpu.memory_space<vmem>>, vector<8x128xf32>
      tpu.vector_store %arg5[%c0_68, %c0_69], %130 {strides = array<i32>} : memref<8x128xf32, #tpu.memory_space<vmem>>, vector<8x128xf32>,
    } else {
    }
    return
  }
  func.func @transform_0(%arg0: i32, %arg1: i32) -> (i32, i32) {
    %c0_i32 = arith.constant 0 : i32
    return %arg0, %arg1 : i32, i32
  }
  func.func @transform_1(%arg0: i32, %arg1: i32) -> (i32, i32) {
    %c0_i32 = arith.constant 0 : i32
    %c0_i32_0 = arith.constant 0 : i32
    return %arg1, %c0_i32 : i32, i32
  }
  func.func @transform_2(%arg0: i32, %arg1: i32) -> (i32, i32) {
    %c0_i32 = arith.constant 0 : i32
    %c0_i32_0 = arith.constant 0 : i32
    return %arg1, %c0_i32 : i32, i32
  }
  func.func @transform_3(%arg0: i32, %arg1: i32) -> (i32, i32) {
    %c0_i32 = arith.constant 0 : i32
    %c0_i32_0 = arith.constant 0 : i32
    return %arg0, %c0_i32 : i32, i32
  }
}

</mosaic_0001>

<llo_original>
// kernel: tpu_custom_call.1
$region0: #{tpu_custom_call.1}
  #allocation0 [shape = 'u32[]', space=smem, size = 0x4, offset = 0x4, fixed_abs, tag = 'smem constant byte address 0x4 - core index']
  #allocation1 [shape = 'u32[144,128]{1,0:T(1,128)}', space=vmem, size = 0x12000, scoped, tag = 'internal scratch']
  #allocation2 [shape = 'f32[8,16]{1,0:T(8,128)}', space=vmem, size = 0x1000, scoped, tag = 'scratch operand']
  #allocation3 [shape = 'f32[8,8]{1,0:T(8,128)}', space=vmem, size = 0x1000, scoped, tag = 'scratch operand']
  #allocation4 [shape = 'f32[8,1]{1,0:T(8,128)}', space=vmem, size = 0x1000, scoped, tag = 'scratch operand']
  #allocation5 [shape = 'f32[1,16]{1,0:T(1,128)}', space=vmem, size = 0x200, scoped, tag = 'scratch operand']
  #allocation6 [shape = 'f32[1,8]{1,0:T(1,128)}', space=vmem, size = 0x200, scoped, tag = 'scratch operand']
  %s0 = inlined_call_operand.vmem [shape: f32[16,128], index: 0, kind: input, shape index: {}]
  %s1 = inlined_call_operand.vmem [shape: f32[128,16], index: 1, kind: input, shape index: {}]
  %s2 = inlined_call_operand.vmem [shape: f32[128,8], index: 2, kind: input, shape index: {}]
  %s3 = inlined_call_operand.hbm [shape: f32[16,128], index: 3, kind: output, shape index: {}]
  %s4 = sld [smem:[#allocation0]]
  $region53: #{tpu_custom_call.1} parent=0
    _
  %s6 = ssub.s32 1, %s4
  %s7 = scalar_select 0, %s6, %s4
  $region1: #{tpu_custom_call.1} parent=0
    #allocation7 [shape = 'u8[8192]{0}', space=vmem, size = 0x2000, scoped, tag = 'output window, operand 0']
    #allocation8 [shape = 's32[2]{0}', space=sflag, size = 0x8, scoped, tag = 'scoped memory for tpu_custom_call.1']
    %8 = vsyncpa [#allocation8], 0
    %s9 = scalar_lea.sflag [#allocation8], 1
    %10 = vsyncpa %s9, 0
    loop: start=0, step=1, limit=4
    $region2: #{tpu_custom_call.1} parent=1 // loop_pre_header
      _
    $region3: #{tpu_custom_call.1} parent=1 // loop_header
      %s12 = sphi 0, %s16
      %p13 = scmp.ge.s32.totalorder %s12, 4
      %s19 = sphi 0, %s31
      %s20 = sphi 0, %s27
      %s21 = sphi 0, %s19
      %s22 = sphi 0, %s20
      %s23 = sphi 0, %s21
      %s24 = sphi 0, %s22
      %s36 = sphi 0, %s38
      %s39 = sphi 0, %s36
      %s40 = sphi 0, %s39
      %s56 = sphi 0, %s40
      %s62 = sphi 0, %s64
      %s65 = sphi 0, %s62
      %s66 = sphi 0, %s65
      %s82 = sphi 0, %s66
      %s88 = sphi 0, %s90
      %s91 = sphi 0, %s88
      %s92 = sphi 0, %s91
      %s108 = sphi 0, %s92
      %s114 = sphi 0, %s116
      %s117 = sphi 0, %s114
      %s118 = sphi 0, %s117
      %s134 = sphi 0, %s118
    $region4: #{tpu_custom_call.1} parent=1 // loop_header_branch
      %15 = sbr.rel (%p13) target = $region8
    $region5: #{tpu_custom_call.1} parent=1 // loop_body
      %s17 = ssub.s32 %s12, 1
      %s18 = ssub.s32 %s12, 2
      %s25 = sadd.s32 1, %s20
      %p26 = scmp.ge.s32.totalorder %s25, 1
      %s27 = scalar_select %p26, 0, %s25
      %s28 = sadd.s32 1, %s19
      %s29 = scalar_select %p26, %s28, %s19
      %p30 = scmp.ge.s32.totalorder %s29, 2
      %s31 = scalar_select %p30, 0, %s29
      %s32 = ssub.s32 %s19, %s31
      %s33 = ssub.s32 %s20, %s27
      %s34 = sor.u32 %s32, %s33
      %p35 = scmp.eq.s32.totalorder %s34, 0
      %s37 = sadd.s32 %s36, 1
      %s38 = scalar_select %p35, %s36, %s37
      %p41 = pneg %p35
      %p42 = scmp.eq.s32.totalorder %s12, 1
      %p43 = por %p41, %p42
      %p44 = scmp.ne.s32.totalorder %s36, %s39
      %p45 = scmp.eq.s32.totalorder %s12, 0
      %p46 = por %p44, %p45
      %p47 = scmp.ne.s32.totalorder %s36, %s39
      %p48 = scmp.eq.s32.totalorder %s17, 1
      %p49 = por %p47, %p48
      %p50 = scmp.ne.s32.totalorder %s39, %s40
      %p51 = scmp.eq.s32.totalorder %s17, 0
      %p52 = por %p50, %p51
      %p53 = scmp.ne.s32.totalorder %s39, %s40
      %p54 = scmp.eq.s32.totalorder %s18, 1
      %p55 = por %p53, %p54
      %p57 = scmp.ne.s32.totalorder %s40, %s56
      %p58 = scmp.eq.s32.totalorder %s18, 0
      %p59 = por %p57, %p58
      %s60 = ssub.s32 %s20, %s27
      %p61 = scmp.eq.s32.totalorder %s60, 0
      %s63 = sadd.s32 %s62, 1
      %s64 = scalar_select %p61, %s62, %s63
      %p67 = pneg %p61
      %p68 = scmp.eq.s32.totalorder %s12, 1
      %p69 = por %p67, %p68
      %p70 = scmp.ne.s32.totalorder %s62, %s65
      %p71 = scmp.eq.s32.totalorder %s12, 0
      %p72 = por %p70, %p71
      %p73 = scmp.ne.s32.totalorder %s62, %s65
      %p74 = scmp.eq.s32.totalorder %s17, 1
      %p75 = por %p73, %p74
      %p76 = scmp.ne.s32.totalorder %s65, %s66
      %p77 = scmp.eq.s32.totalorder %s17, 0
      %p78 = por %p76, %p77
      %p79 = scmp.ne.s32.totalorder %s65, %s66
      %p80 = scmp.eq.s32.totalorder %s18, 1
      %p81 = por %p79, %p80
      %p83 = scmp.ne.s32.totalorder %s66, %s82
      %p84 = scmp.eq.s32.totalorder %s18, 0
      %p85 = por %p83, %p84
      %s86 = ssub.s32 %s20, %s27
      %p87 = scmp.eq.s32.totalorder %s86, 0
      %s89 = sadd.s32 %s88, 1
      %s90 = scalar_select %p87, %s88, %s89
      %p93 = pneg %p87
      %p94 = scmp.eq.s32.totalorder %s12, 1
      %p95 = por %p93, %p94
      %p96 = scmp.ne.s32.totalorder %s88, %s91
      %p97 = scmp.eq.s32.totalorder %s12, 0
      %p98 = por %p96, %p97
      %p99 = scmp.ne.s32.totalorder %s88, %s91
      %p100 = scmp.eq.s32.totalorder %s17, 1
      %p101 = por %p99, %p100
      %p102 = scmp.ne.s32.totalorder %s91, %s92
      %p103 = scmp.eq.s32.totalorder %s17, 0
      %p104 = por %p102, %p103
      %p105 = scmp.ne.s32.totalorder %s91, %s92
      %p106 = scmp.eq.s32.totalorder %s18, 1
      %p107 = por %p105, %p106
      %p109 = scmp.ne.s32.totalorder %s92, %s108
      %p110 = scmp.eq.s32.totalorder %s18, 0
      %p111 = por %p109, %p110
      %s112 = ssub.s32 %s19, %s31
      %p113 = scmp.eq.s32.totalorder %s112, 0
      %s115 = sadd.s32 %s114, 1
      %s116 = scalar_select %p113, %s114, %s115
      %p119 = pneg %p113
      %p120 = scmp.eq.s32.totalorder %s12, 1
      %p121 = por %p119, %p120
      %p122 = scmp.ne.s32.totalorder %s114, %s117
      %p123 = scmp.eq.s32.totalorder %s12, 0
      %p124 = por %p122, %p123
      %p125 = scmp.ne.s32.totalorder %s114, %s117
      %p126 = scmp.eq.s32.totalorder %s17, 1
      %p127 = por %p125, %p126
      %p128 = scmp.ne.s32.totalorder %s117, %s118
      %p129 = scmp.eq.s32.totalorder %s17, 0
      %p130 = por %p128, %p129
      %p131 = scmp.ne.s32.totalorder %s117, %s118
      %p132 = scmp.eq.s32.totalorder %s18, 1
      %p133 = por %p131, %p132
      %p135 = scmp.ne.s32.totalorder %s118, %s134
      %p136 = scmp.eq.s32.totalorder %s18, 0
      %p137 = por %p135, %p136
      %p138 = scmp.le.s32.totalorder 1, %s12
      %p139 = scmp.lt.s32.totalorder %s12, 3
      %p140 = pnand %p138, %p139
      %p141 = pneg %p140
      // Predicated region
      $region9: #{tpu_custom_call.1} parent=5 // pred_check
        _
      $region10: #{tpu_custom_call.1} parent=5 // pred_check_branch
        %143 = sbr.rel (%p140) target = $region12
      $region11: #{tpu_custom_call.1} parent=5 // pred_region
        %s144 = ssub.s32 %s12, 1
        // Predicated region
        $region13: #{tpu_custom_call.1} parent=11 // pred_check
          %p145 = pneg %p78
        $region14: #{tpu_custom_call.1} parent=11 // pred_check_branch
          %147 = sbr.rel (%p145) target = $region16
        $region15: #{tpu_custom_call.1} parent=11 // pred_region
          %s148 = smul.u32 16, %s22
          %p149 = scmp.lt.s32.totalorder %s148, 15
          %s150 = scalar_select %p149, %s148, 15
          %s151 = smul.addr %s150, 8
          %s152 = scalar_lea.vmem %s1, %s151
          %s153 = smul.u32 16, %s22
        $region16: #{tpu_custom_call.1} parent=11 // pred_fallthru
          _
        // Predicated region
        $region17: #{tpu_custom_call.1} parent=11 // pred_check
          %p154 = pneg %p104
        $region18: #{tpu_custom_call.1} parent=11 // pred_check_branch
          %156 = sbr.rel (%p154) target = $region20
        $region19: #{tpu_custom_call.1} parent=11 // pred_region
          %s157 = smul.u32 16, %s22
          %p158 = scmp.lt.s32.totalorder %s157, 15
          %s159 = scalar_select %p158, %s157, 15
          %s160 = smul.addr %s159, 8
          %s161 = scalar_lea.vmem %s2, %s160
          %s162 = smul.u32 16, %s22
        $region20: #{tpu_custom_call.1} parent=11 // pred_fallthru
          _
      $region12: #{tpu_custom_call.1} parent=5 // pred_fallthru
        _
      %p163 = scmp.lt.s32.totalorder %s12, 2
      // Predicated region
      $region21: #{tpu_custom_call.1} parent=5 // pred_check
        %p164 = pneg %p163
      $region22: #{tpu_custom_call.1} parent=5 // pred_check_branch
        %166 = sbr.rel (%p164) target = $region24
      $region23: #{tpu_custom_call.1} parent=5 // pred_region
        // Predicated region
        $region25: #{tpu_custom_call.1} parent=23 // pred_check
          %p167 = pneg %p46
        $region26: #{tpu_custom_call.1} parent=23 // pred_check_branch
          %169 = sbr.rel (%p167) target = $region28
        $region27: #{tpu_custom_call.1} parent=23 // pred_region
          %p170 = scmp.lt.s32.totalorder %s19, 1
          %s171 = scalar_select %p170, %s19, 1
          %p172 = scmp.lt.s32.totalorder %s20, 0
          %s173 = scalar_select %p172, %s20, 0
          %s174 = sadd.s32 %s173, %s171
          %s175 = smul.addr %s174, 8
          %s176 = scalar_lea.vmem %s0, %s175
        $region28: #{tpu_custom_call.1} parent=23 // pred_fallthru
          _
      $region24: #{tpu_custom_call.1} parent=5 // pred_fallthru
        _
      %p177 = scmp.le.s32.totalorder 1, %s12
      %p178 = scmp.lt.s32.totalorder %s12, 3
      %p179 = pnand %p177, %p178
      %p180 = pneg %p179
      // Predicated region
      $region29: #{tpu_custom_call.1} parent=5 // pred_check
        _
      $region30: #{tpu_custom_call.1} parent=5 // pred_check_branch
        %182 = sbr.rel (%p179) target = $region32
      $region31: #{tpu_custom_call.1} parent=5 // pred_region
        %s183 = ssub.s32 %s12, 1
        %p184 = scmp.lt.s32.totalorder %s21, 1
        %s185 = scalar_select %p184, %s21, 1
        %p186 = scmp.lt.s32.totalorder %s22, 0
        %s187 = scalar_select %p186, %s22, 0
        %s188 = sadd.s32 %s187, %s185
        %s189 = smul.addr %s188, 8
        %s190 = scalar_lea.vmem %s0, %s189
        %p191 = pneg %p52
        %p192 = pneg %p49
        %s193 = smul.u32 16, %s22
        %p194 = scmp.lt.s32.totalorder %s193, 15
        %s195 = scalar_select %p194, %s193, 15
        %s196 = smul.addr %s195, 8
        %s197 = scalar_lea.vmem %s1, %s196
        %p198 = pneg %p78
        %p199 = pneg %p75
        %s200 = smul.u32 16, %s22
        %p201 = scmp.lt.s32.totalorder %s200, 15
        %s202 = scalar_select %p201, %s200, 15
        %s203 = smul.addr %s202, 8
        %s204 = scalar_lea.vmem %s2, %s203
        %p205 = pneg %p104
        %p206 = pneg %p101
        %p207 = pneg %p130
        %p208 = pneg %p127
        %s209 = sand.u32 %s117, 1
        %s210 = scalar_lea.sflag [#allocation8], %s209
        %s211 = sand.u32 %s117, 1
        %s212 = smul.addr %s211, 8
        %s213 = scalar_lea.vmem [#allocation7], %s212
        %p214 = scmp.lt.s32.totalorder %s21, 1
        %s215 = scalar_select %p214, %s21, 1
        %p216 = scmp.lt.s32.totalorder %s22, 0
        %s217 = scalar_select %p216, %s22, 0
        %s218 = sadd.s32 %s217, %s215
        %s219 = smul.addr %s218, 8
        %s220 = scalar_lea.vmem %s0, %s219
        %s221 = smul.u32 16, %s22
        %p222 = scmp.lt.s32.totalorder %s221, 15
        %s223 = scalar_select %p222, %s221, 15
        %s224 = smul.addr %s223, 8
        %s225 = scalar_lea.vmem %s1, %s224
        %s226 = smul.u32 16, %s22
        %s227 = smul.u32 16, %s22
        %p228 = scmp.lt.s32.totalorder %s227, 15
        %s229 = scalar_select %p228, %s227, 15
        %s230 = smul.addr %s229, 8
        %s231 = scalar_lea.vmem %s2, %s230
        %s232 = smul.u32 16, %s22
        %p233 = scmp.eq.s32.totalorder %s22, 0
        // Predicated region
        $region33: #{tpu_custom_call.1} parent=31 // pred_check
          %p234 = pneg %p233
        $region34: #{tpu_custom_call.1} parent=31 // pred_check_branch
          %236 = sbr.rel (%p234) target = $region36
        $region35: #{tpu_custom_call.1} parent=31 // pred_region
          %vm237 = vcmask 130048
          %238 = vst.msk [vmem:[#allocation2] sm:$0xff] %vm237, 0.0
          %vm239 = vcmask 64512
          %240 = vst.msk [vmem:[#allocation3] sm:$0xff] %vm239, 0.0
          %vm241 = vcmask 7168
          %242 = vst.msk [vmem:[#allocation4] sm:$0xff] %vm241, 0.0
          %vm243 = vcmask 122880
          %244 = vst.msk [vmem:[#allocation5] sm:$0x1] %vm243, 0.0
          %vm245 = vcmask 57344
          %246 = vst.msk [vmem:[#allocation6] sm:$0x1] %vm245, 0.0
        $region36: #{tpu_custom_call.1} parent=31 // pred_fallthru
          _
        %v247 = vld [vmem:[%s220] sm:$0xff]
        %v248 = vld [vmem:[%s225] sm:$0xff]
        %v249 = vld [vmem:[%s225 + $0x8] sm:$0xff]
        %v250 = vld [vmem:[%s225 + $0x10] sm:$0xff]
        %v251 = vld [vmem:[%s225 + $0x18] sm:$0xff]
        %v252 = vld [vmem:[%s225 + $0x20] sm:$0xff]
        %v253 = vld [vmem:[%s225 + $0x28] sm:$0xff]
        %v254 = vld [vmem:[%s225 + $0x30] sm:$0xff]
        %v255 = vld [vmem:[%s225 + $0x38] sm:$0xff]
        %v256 = vld [vmem:[%s225 + $0x40] sm:$0xff]
        %v257 = vld [vmem:[%s225 + $0x48] sm:$0xff]
        %v258 = vld [vmem:[%s225 + $0x50] sm:$0xff]
        %v259 = vld [vmem:[%s225 + $0x58] sm:$0xff]
        %v260 = vld [vmem:[%s225 + $0x60] sm:$0xff]
        %v261 = vld [vmem:[%s225 + $0x68] sm:$0xff]
        %v262 = vld [vmem:[%s225 + $0x70] sm:$0xff]
        %v263 = vld [vmem:[%s225 + $0x78] sm:$0xff]
        %v264 = vld [vmem:[#allocation2] sm:$0xff]
        %265 = vmatprep.subr.mxu0 0.0
        %266 = vmatpush1.msra.mxu0 %v248
        %267 = vmatprep.subr.mxu0 0.0
        %268 = vmatpush1.msra.mxu0 %v249
        %269 = vmatprep.subr.mxu0 0.0
        %270 = vmatpush1.msra.mxu0 %v250
        %271 = vmatprep.subr.mxu0 0.0
        %272 = vmatpush1.msra.mxu0 %v251
        %273 = vmatprep.subr.mxu0 0.0
        %274 = vmatpush1.msra.mxu0 %v252
        %275 = vmatprep.subr.mxu0 0.0
        %276 = vmatpush1.msra.mxu0 %v253
        %277 = vmatprep.subr.mxu0 0.0
        %278 = vmatpush1.msra.mxu0 %v254
        %279 = vmatprep.subr.mxu0 0.0
        %280 = vmatpush1.msra.mxu0 %v255
        %281 = vmatprep.subr.mxu0 0.0
        %282 = vmatpush1.msra.mxu0 %v256
        %283 = vmatprep.subr.mxu0 0.0
        %284 = vmatpush1.msra.mxu0 %v257
        %285 = vmatprep.subr.mxu0 0.0
        %286 = vmatpush1.msra.mxu0 %v258
        %287 = vmatprep.subr.mxu0 0.0
        %288 = vmatpush1.msra.mxu0 %v259
        %289 = vmatprep.subr.mxu0 0.0
        %290 = vmatpush1.msra.mxu0 %v260
        %291 = vmatprep.subr.mxu0 0.0
        %292 = vmatpush1.msra.mxu0 %v261
        %293 = vmatprep.subr.mxu0 0.0
        %294 = vmatpush1.msra.mxu0 %v262
        %295 = vmatprep.subr.mxu0 0.0
        %296 = vmatpush1.msra.mxu0 %v263
        %297 = vmatprep.subr.mxu0 0.0
        %298 = vmatpush1.msra.mxu0 0.0
        %299 = vmatprep.subr.mxu0 0.0
        %300 = vmatpush1.msra.mxu0 0.0
        %301 = vmatprep.subr.mxu0 0.0
        %302 = vmatpush1.msra.mxu0 0.0
        %303 = vmatprep.subr.mxu0 0.0
        %304 = vmatpush1.msra.mxu0 0.0
        %305 = vmatprep.subr.mxu0 0.0
        %306 = vmatpush1.msra.mxu0 0.0
        %307 = vmatprep.subr.mxu0 0.0
        %308 = vmatpush1.msra.mxu0 0.0
        %309 = vmatprep.subr.mxu0 0.0
        %310 = vmatpush1.msra.mxu0 0.0
        %311 = vmatprep.subr.mxu0 0.0
        %312 = vmatpush1.msra.mxu0 0.0
        %313 = vmatprep.subr.mxu0 0.0
        %314 = vmatpush1.msra.mxu0 0.0
        %315 = vmatprep.subr.mxu0 0.0
        %316 = vmatpush1.msra.mxu0 0.0
        %317 = vmatprep.subr.mxu0 0.0
        %318 = vmatpush1.msra.mxu0 0.0
        %319 = vmatprep.subr.mxu0 0.0
        %320 = vmatpush1.msra.mxu0 0.0
        %321 = vmatprep.subr.mxu0 0.0
        %322 = vmatpush1.msra.mxu0 0.0
        %323 = vmatprep.subr.mxu0 0.0
        %324 = vmatpush1.msra.mxu0 0.0
        %325 = vmatprep.subr.mxu0 0.0
        %326 = vmatpush1.msra.mxu0 0.0
        %327 = vmatprep.subr.mxu0 0.0
        %328 = vmatpush1.msra.mxu0 0.0
        %329 = vmatprep.mubr.f32.mxu0 0.0
        %330 = vmatmul.mubr.f32.gmra.mrb[0].mxu0 %v247
        %v331 = vpop.f32.mrb[0].mxu0
        %v332 = vadd.f32 0.0, %v331
        %v333 = vpop.f32.mrb[0].mxu0
        %334 = vdwg.mxu0
        %v335 = vadd.f32 %v264, %v332
        %vm336 = vcmask 130048
        %337 = vst.msk [vmem:[#allocation2] sm:$0xff] %vm336, %v335
        %v338 = vld [vmem:[%s231] sm:$0xff]
        %v339 = vld [vmem:[%s231 + $0x8] sm:$0xff]
        %v340 = vld [vmem:[%s231 + $0x10] sm:$0xff]
        %v341 = vld [vmem:[%s231 + $0x18] sm:$0xff]
        %v342 = vld [vmem:[%s231 + $0x20] sm:$0xff]
        %v343 = vld [vmem:[%s231 + $0x28] sm:$0xff]
        %v344 = vld [vmem:[%s231 + $0x30] sm:$0xff]
        %v345 = vld [vmem:[%s231 + $0x38] sm:$0xff]
        %v346 = vld [vmem:[%s231 + $0x40] sm:$0xff]
        %v347 = vld [vmem:[%s231 + $0x48] sm:$0xff]
        %v348 = vld [vmem:[%s231 + $0x50] sm:$0xff]
        %v349 = vld [vmem:[%s231 + $0x58] sm:$0xff]
        %v350 = vld [vmem:[%s231 + $0x60] sm:$0xff]
        %v351 = vld [vmem:[%s231 + $0x68] sm:$0xff]
        %v352 = vld [vmem:[%s231 + $0x70] sm:$0xff]
        %v353 = vld [vmem:[%s231 + $0x78] sm:$0xff]
        %v354 = vld [vmem:[#allocation3] sm:$0xff]
        %355 = vmatprep.subr.mxu0 0.0
        %356 = vmatpush1.msra.mxu0 %v338
        %357 = vmatprep.subr.mxu0 0.0
        %358 = vmatpush1.msra.mxu0 %v339
        %359 = vmatprep.subr.mxu0 0.0
        %360 = vmatpush1.msra.mxu0 %v340
        %361 = vmatprep.subr.mxu0 0.0
        %362 = vmatpush1.msra.mxu0 %v341
        %363 = vmatprep.subr.mxu0 0.0
        %364 = vmatpush1.msra.mxu0 %v342
        %365 = vmatprep.subr.mxu0 0.0
        %366 = vmatpush1.msra.mxu0 %v343
        %367 = vmatprep.subr.mxu0 0.0
        %368 = vmatpush1.msra.mxu0 %v344
        %369 = vmatprep.subr.mxu0 0.0
        %370 = vmatpush1.msra.mxu0 %v345
        %371 = vmatprep.subr.mxu0 0.0
        %372 = vmatpush1.msra.mxu0 %v346
        %373 = vmatprep.subr.mxu0 0.0
        %374 = vmatpush1.msra.mxu0 %v347
        %375 = vmatprep.subr.mxu0 0.0
        %376 = vmatpush1.msra.mxu0 %v348
        %377 = vmatprep.subr.mxu0 0.0
        %378 = vmatpush1.msra.mxu0 %v349
        %379 = vmatprep.subr.mxu0 0.0
        %380 = vmatpush1.msra.mxu0 %v350
        %381 = vmatprep.subr.mxu0 0.0
        %382 = vmatpush1.msra.mxu0 %v351
        %383 = vmatprep.subr.mxu0 0.0
        %384 = vmatpush1.msra.mxu0 %v352
        %385 = vmatprep.subr.mxu0 0.0
        %386 = vmatpush1.msra.mxu0 %v353
        %387 = vmatprep.subr.mxu0 0.0
        %388 = vmatpush1.msra.mxu0 0.0
        %389 = vmatprep.subr.mxu0 0.0
        %390 = vmatpush1.msra.mxu0 0.0
        %391 = vmatprep.subr.mxu0 0.0
        %392 = vmatpush1.msra.mxu0 0.0
        %393 = vmatprep.subr.mxu0 0.0
        %394 = vmatpush1.msra.mxu0 0.0
        %395 = vmatprep.subr.mxu0 0.0
        %396 = vmatpush1.msra.mxu0 0.0
        %397 = vmatprep.subr.mxu0 0.0
        %398 = vmatpush1.msra.mxu0 0.0
        %399 = vmatprep.subr.mxu0 0.0
        %400 = vmatpush1.msra.mxu0 0.0
        %401 = vmatprep.subr.mxu0 0.0
        %402 = vmatpush1.msra.mxu0 0.0
        %403 = vmatprep.subr.mxu0 0.0
        %404 = vmatpush1.msra.mxu0 0.0
        %405 = vmatprep.subr.mxu0 0.0
        %406 = vmatpush1.msra.mxu0 0.0
        %407 = vmatprep.subr.mxu0 0.0
        %408 = vmatpush1.msra.mxu0 0.0
        %409 = vmatprep.subr.mxu0 0.0
        %410 = vmatpush1.msra.mxu0 0.0
        %411 = vmatprep.subr.mxu0 0.0
        %412 = vmatpush1.msra.mxu0 0.0
        %413 = vmatprep.subr.mxu0 0.0
        %414 = vmatpush1.msra.mxu0 0.0
        %415 = vmatprep.subr.mxu0 0.0
        %416 = vmatpush1.msra.mxu0 0.0
        %417 = vmatprep.subr.mxu0 0.0
        %418 = vmatpush1.msra.mxu0 0.0
        %419 = vmatprep.mubr.f32.mxu0 0.0
        %420 = vmatmul.mubr.f32.gmra.mrb[0].mxu0 %v247
        %v421 = vpop.f32.mrb[0].mxu0
        %v422 = vadd.f32 0.0, %v421
        %v423 = vpop.f32.mrb[0].mxu0
        %424 = vdwg.mxu0
        %v425 = vadd.f32 %v354, %v422
        %vm426 = vcmask 64512
        %427 = vst.msk [vmem:[#allocation3] sm:$0xff] %vm426, %v425
        %v428 = vld [vmem:[#allocation4] sm:$0xff]
        %v429 = vmul.f32 %v247, %v247
        %430 = vadd.xlane.f32.xlu0 %v429
        %v431 = vpop.xlane.xlu0 %430
        %v432 = vadd.f32 %v428, %v431
        %vm433 = vcmask 7168
        %434 = vst.msk [vmem:[#allocation4] sm:$0xff] %vm433, %v432
        %v435 = vld [vmem:[#allocation5] sm:$0x1]
        %v436 = vmul.f32 %v248, %v248
        %v437 = vmul.f32 %v249, %v249
        %v438 = vmul.f32 %v250, %v250
        %v439 = vmul.f32 %v251, %v251
        %v440 = vmul.f32 %v252, %v252
        %v441 = vmul.f32 %v253, %v253
        %v442 = vmul.f32 %v254, %v254
        %v443 = vmul.f32 %v255, %v255
        %v444 = vmul.f32 %v256, %v256
        %v445 = vmul.f32 %v257, %v257
        %v446 = vmul.f32 %v258, %v258
        %v447 = vmul.f32 %v259, %v259
        %v448 = vmul.f32 %v260, %v260
        %v449 = vmul.f32 %v261, %v261
        %v450 = vmul.f32 %v262, %v262
        %v451 = vmul.f32 %v263, %v263
        %v452 = vsel %vm336, %v436, 0.0
        %v453 = vsel %vm336, %v437, 0.0
        %v454 = vadd.f32 %v452, %v453
        %v455 = vsel %vm336, %v438, 0.0
        %v456 = vadd.f32 %v454, %v455
        %v457 = vsel %vm336, %v439, 0.0
        %v458 = vadd.f32 %v456, %v457
        %v459 = vsel %vm336, %v440, 0.0
        %v460 = vadd.f32 %v458, %v459
        %v461 = vsel %vm336, %v441, 0.0
        %v462 = vadd.f32 %v460, %v461
        %v463 = vsel %vm336, %v442, 0.0
        %v464 = vadd.f32 %v462, %v463
        %v465 = vsel %vm336, %v443, 0.0
        %v466 = vadd.f32 %v464, %v465
        %v467 = vsel %vm336, %v444, 0.0
        %v468 = vadd.f32 %v466, %v467
        %v469 = vsel %vm336, %v445, 0.0
        %v470 = vadd.f32 %v468, %v469
        %v471 = vsel %vm336, %v446, 0.0
        %v472 = vadd.f32 %v470, %v471
        %v473 = vsel %vm336, %v447, 0.0
        %v474 = vadd.f32 %v472, %v473
        %v475 = vsel %vm336, %v448, 0.0
        %v476 = vadd.f32 %v474, %v475
        %v477 = vsel %vm336, %v449, 0.0
        %v478 = vadd.f32 %v476, %v477
        %v479 = vsel %vm336, %v450, 0.0
        %v480 = vadd.f32 %v478, %v479
        %v481 = vsel %vm336, %v451, 0.0
        %v482 = vadd.f32 %v480, %v481
        %v483 = vrot.slane %v482, 4
        %v484 = vadd.f32 %v482, %v483
        %v485 = vrot.slane %v484, 2
        %v486 = vadd.f32 %v484, %v485
        %v487 = vrot.slane %v486, 1
        %v488 = vadd.f32 %v486, %v487
        %v489 = vadd.f32 %v435, %v488
        %vm490 = vcmask 122880
        %491 = vst.msk [vmem:[#allocation5] sm:$0x1] %vm490, %v489
        %v492 = vld [vmem:[%s231] sm:$0xff]
        %v493 = vld [vmem:[%s231 + $0x8] sm:$0xff]
        %v494 = vld [vmem:[%s231 + $0x10] sm:$0xff]
        %v495 = vld [vmem:[%s231 + $0x18] sm:$0xff]
        %v496 = vld [vmem:[%s231 + $0x20] sm:$0xff]
        %v497 = vld [vmem:[%s231 + $0x28] sm:$0xff]
        %v498 = vld [vmem:[%s231 + $0x30] sm:$0xff]
        %v499 = vld [vmem:[%s231 + $0x38] sm:$0xff]
        %v500 = vld [vmem:[%s231 + $0x40] sm:$0xff]
        %v501 = vld [vmem:[%s231 + $0x48] sm:$0xff]
        %v502 = vld [vmem:[%s231 + $0x50] sm:$0xff]
        %v503 = vld [vmem:[%s231 + $0x58] sm:$0xff]
        %v504 = vld [vmem:[%s231 + $0x60] sm:$0xff]
        %v505 = vld [vmem:[%s231 + $0x68] sm:$0xff]
        %v506 = vld [vmem:[%s231 + $0x70] sm:$0xff]
        %v507 = vld [vmem:[%s231 + $0x78] sm:$0xff]
        %v508 = vld [vmem:[#allocation6] sm:$0x1]
        %v509 = vmul.f32 %v492, %v492
        %v510 = vmul.f32 %v493, %v493
        %v511 = vmul.f32 %v494, %v494
        %v512 = vmul.f32 %v495, %v495
        %v513 = vmul.f32 %v496, %v496
        %v514 = vmul.f32 %v497, %v497
        %v515 = vmul.f32 %v498, %v498
        %v516 = vmul.f32 %v499, %v499
        %v517 = vmul.f32 %v500, %v500
        %v518 = vmul.f32 %v501, %v501
        %v519 = vmul.f32 %v502, %v502
        %v520 = vmul.f32 %v503, %v503
        %v521 = vmul.f32 %v504, %v504
        %v522 = vmul.f32 %v505, %v505
        %v523 = vmul.f32 %v506, %v506
        %v524 = vmul.f32 %v507, %v507
        %v525 = vsel %vm426, %v509, 0.0
        %v526 = vsel %vm426, %v510, 0.0
        %v527 = vadd.f32 %v525, %v526
        %v528 = vsel %vm426, %v511, 0.0
        %v529 = vadd.f32 %v527, %v528
        %v530 = vsel %vm426, %v512, 0.0
        %v531 = vadd.f32 %v529, %v530
        %v532 = vsel %vm426, %v513, 0.0
        %v533 = vadd.f32 %v531, %v532
        %v534 = vsel %vm426, %v514, 0.0
        %v535 = vadd.f32 %v533, %v534
        %v536 = vsel %vm426, %v515, 0.0
        %v537 = vadd.f32 %v535, %v536
        %v538 = vsel %vm426, %v516, 0.0
        %v539 = vadd.f32 %v537, %v538
        %v540 = vsel %vm426, %v517, 0.0
        %v541 = vadd.f32 %v539, %v540
        %v542 = vsel %vm426, %v518, 0.0
        %v543 = vadd.f32 %v541, %v542
        %v544 = vsel %vm426, %v519, 0.0
        %v545 = vadd.f32 %v543, %v544
        %v546 = vsel %vm426, %v520, 0.0
        %v547 = vadd.f32 %v545, %v546
        %v548 = vsel %vm426, %v521, 0.0
        %v549 = vadd.f32 %v547, %v548
        %v550 = vsel %vm426, %v522, 0.0
        %v551 = vadd.f32 %v549, %v550
        %v552 = vsel %vm426, %v523, 0.0
        %v553 = vadd.f32 %v551, %v552
        %v554 = vsel %vm426, %v524, 0.0
        %v555 = vadd.f32 %v553, %v554
        %v556 = vrot.slane %v555, 4
        %v557 = vadd.f32 %v555, %v556
        %v558 = vrot.slane %v557, 2
        %v559 = vadd.f32 %v557, %v558
        %v560 = vrot.slane %v559, 1
        %v561 = vadd.f32 %v559, %v560
        %v562 = vadd.f32 %v508, %v561
        %vm563 = vcmask 57344
        %564 = vst.msk [vmem:[#allocation6] sm:$0x1] %vm563, %v562
        // Predicated region
        $region37: #{tpu_custom_call.1} parent=31 // pred_check
          %p565 = pneg %p233
        $region38: #{tpu_custom_call.1} parent=31 // pred_check_branch
          %567 = sbr.rel (%p565) target = $region40
        $region39: #{tpu_custom_call.1} parent=31 // pred_region
          %v568 = vld [vmem:[#allocation2] sm:$0xff]
          %v569 = vlaneseq
          %v570 = vshrl.u32 %v569, 7
          %v571 = vlaneseq
          %v572 = vand.u32 %v571, 127
          %s573 = smul.u32 %s21, 8
          %v574 = vstv %s573
          %v575 = vadd.s32 %v570, %v574
          %v576 = vld [vmem:[#allocation4] sm:$0xff]
          %v577 = vmax.f32 %v576, 1e-30
          %v578 = vrsqrt.pop %v577
          %v579 = vld [vmem:[#allocation5] sm:$0x1]
          %v580 = vmax.f32 %v579, 1e-30
          %v581 = vrsqrt.pop %v580
          %583 = vset.pattern.permute.xlu0 0
          %584 = vperm.xlu0 %583, %v578
          %v585 = vpop.permute.xlu0 %584
          %v587 = vmul.f32 %v568, %v585
          %v589 = vlaneseq
          %v590 = vshrl.u32 %v589, 7
          %v591 = vsub.s32 0, %v590
          %v592 = vrot.slane %v581, %v591
          %v594 = vmul.f32 %v587, %v592
          %v595 = vmul.f32 %v594, 2.0
          %v596 = vsub.s32 %v575, %v572
          %vm597 = vcmp.lt.s32.totalorder %v596, 0
          %v598 = vsub.s32 0, %v596
          %v599 = vsel %vm597, %v598, %v596
          %vm600 = vcmp.eq.s32.totalorder %v599, 8
          %v601 = vsel %vm600, %v595, 0.0
          %v602 = vsel %vm336, %v601, 0.0
          %603 = vadd.xlane.f32.xlu0 %v602
          %v604 = vpop.xlane.xlu0 %603
          %vm605 = vcmp.lt.s32.totalorder %v572, 8
          %vm606 = vcmp.ge.s32.totalorder %v572, 8
          %vm607 = vcmp.lt.s32.totalorder %v572, 16
          %vm608 = vmand %vm606, %vm607
          %vm609 = vmor %vm605, %vm608
          %vm610 = vcmp.eq.s32.totalorder %v575, %v572
          %vm611 = vmxor %vm609, 1
          %vm612 = vmor %vm610, %vm611
          %v613 = vsel %vm612, -inf, %v595
          %v614 = vsel %vm336, %v613, -inf
          %615 = vmax.xlane.f32.xlu0 %v614
          %v616 = vpop.xlane.xlu0 %615
          %v617 = vld [vmem:[#allocation3] sm:$0xff]
          %v618 = vld [vmem:[#allocation6] sm:$0x1]
          %v619 = vmax.f32 %v618, 1e-30
          %v620 = vrsqrt.pop %v619
          %v621 = vmul.f32 %v617, %v585
          %v623 = vlaneseq
          %v624 = vshrl.u32 %v623, 7
          %v625 = vsub.s32 0, %v624
          %v626 = vrot.slane %v620, %v625
          %v628 = vmul.f32 %v621, %v626
          %v629 = vmul.f32 %v628, 2.0
          %v630 = vsel %vm605, %v629, -inf
          %v631 = vsel %vm426, %v630, -inf
          %632 = vmax.xlane.f32.xlu0 %v631
          %v633 = vpop.xlane.xlu0 %632
          %v634 = vmax.f32 %v616, %v633
          %v635 = vsub.f32 %v613, %v634
          %v636 = vmul.f32 %v635, 1.442695
          %v637 = vpow.pop %v636
          %v638 = vsel %vm336, %v637, 0.0
          %639 = vadd.xlane.f32.xlu0 %v638
          %v640 = vpop.xlane.xlu0 %639
          %v641 = vsub.f32 %v630, %v634
          %v642 = vmul.f32 %v641, 1.442695
          %v643 = vpow.pop %v642
          %v644 = vsel %vm426, %v643, 0.0
          %645 = vadd.xlane.f32.xlu0 %v644
          %v646 = vpop.xlane.xlu0 %645
          %v647 = vadd.f32 %v640, %v646
          %v648 = vlog2.pop %v647
          %v649 = vmul.f32 %v648, 0.6931472
          %v650 = vadd.f32 %v634, %v649
          %vm651 = vcmp.lt.s32.totalorder %v575, 8
          %vm652 = vcmp.ge.s32.totalorder %v575, 8
          %vm653 = vcmp.lt.s32.totalorder %v575, 16
          %vm654 = vmand %vm652, %vm653
          %vm655 = vmor %vm651, %vm654
          %v656 = vsub.f32 %v650, %v604
          %v657 = vsel %vm655, %v656, 0.0
          %v658 = vsel %vm433, %v657, 0.0
          %659 = vadd.xlane.f32.xlu0 %v658
          %v660 = vpop.xlane.xlu0 %659
          %v661 = vrot.slane %v660, 4
          %v662 = vadd.f32 %v660, %v661
          %v663 = vrot.slane %v662, 2
          %v664 = vadd.f32 %v662, %v663
          %v665 = vrot.slane %v664, 1
          %v666 = vadd.f32 %v664, %v665
          %s667 = vtos %v666
          %v668 = vstv %s667
          %669 = vst [vmem:[%s213] sm:$0xff] %v668
        $region40: #{tpu_custom_call.1} parent=31 // pred_fallthru
          _
        %s670 = sand.u32 %s117, 1
        %s671 = scalar_lea.sflag [#allocation8], %s670
        %s672 = sand.u32 %s117, 1
        %s673 = smul.addr %s672, 8
        %s674 = scalar_lea.vmem [#allocation7], %s673
        // Predicated region
        $region41: #{tpu_custom_call.1} parent=31 // pred_check
          %p675 = pneg %p127
        $region42: #{tpu_custom_call.1} parent=31 // pred_check_branch
          %677 = sbr.rel (%p675) target = $region44
        $region43: #{tpu_custom_call.1} parent=31 // pred_region
          %s679 = ssub.s32 128, 128
          %680 = vsyncadd %s671, %s679
          %s681 = smul.addr %s21, 128
          %s682 = scalar_lea.hbm %s3, %s681
          %s684 = sshll.u32 %s674, 4
          %s685 = int_to_ptr.vmem [resolvable:$true] %s684
          %687 = dma.vmem_to_hbm [thread:$0]  %s685, 128, %s682, %s671
        $region44: #{tpu_custom_call.1} parent=31 // pred_fallthru
          _
      $region32: #{tpu_custom_call.1} parent=5 // pred_fallthru
        _
      %p688 = scmp.le.s32.totalorder 2, %s12
      // Predicated region
      $region45: #{tpu_custom_call.1} parent=5 // pred_check
        %p689 = pneg %p688
      $region46: #{tpu_custom_call.1} parent=5 // pred_check_branch
        %691 = sbr.rel (%p689) target = $region48
      $region47: #{tpu_custom_call.1} parent=5 // pred_region
        %s692 = ssub.s32 %s12, 2
        // Predicated region
        $region49: #{tpu_custom_call.1} parent=47 // pred_check
          %p693 = pneg %p133
        $region50: #{tpu_custom_call.1} parent=47 // pred_check_branch
          %695 = sbr.rel (%p693) target = $region52
        $region51: #{tpu_custom_call.1} parent=47 // pred_region
          %s696 = sand.u32 %s118, 1
          %s697 = scalar_lea.sflag [#allocation8], %s696
          %s698 = sand.u32 %s118, 1
          %s699 = smul.addr %s698, 8
          %s700 = scalar_lea.vmem [#allocation7], %s699
          %701 = dma.done %s697, 128
        $region52: #{tpu_custom_call.1} parent=47 // pred_fallthru
          _
      $region48: #{tpu_custom_call.1} parent=5 // pred_fallthru
        _
    $region6: #{tpu_custom_call.1} parent=1 // loop_footer
      %s16 = sadd.s32 1, %s12
    $region7: #{tpu_custom_call.1} parent=1 // loop_footer_branch
      %11 = sbr.rel target = $region3
    $region8: #{tpu_custom_call.1} parent=1 // loop_exit
      _
    %702 = vsyncpa [#allocation8], 1
    %s703 = scalar_lea.sflag [#allocation8], 1
    %704 = vsyncpa %s703, 1

</llo_original>
